<compile_context>
chip_gen: v5e
topology: v5e:2x2
jax: 0.10.0
libtpu: 0.0.40
codegen_flags: <defaults>
</compile_context>

<pallas_src>
import functools

import jax
import jax.numpy as jnp
from jax.experimental import pallas as pl
from jax.experimental.pallas import tpu as pltpu


_ROW_CHUNK = 4096          # max rows per pallas_call (bounds the lse/m/l VMEM buffers)
_NEG_INF_BIAS = -1e30      # bias of padded vocab columns: exp() == 0, lse unaffected


def _round_up(n, m):
    return ((n + m - 1) // m) * m


def _vmem_limit_bytes():
    """Generation-aware VMEM limit: ~85% of physical, capped at 112 MiB."""
    cap = None
    try:
        cap = int(pltpu.get_tpu_info().vmem_capacity_bytes)
    except Exception:
        cap = None
    if not cap or cap <= 0:
        cap = 64 * 1024 * 1024        # conservative fallback (v7x physical VMEM)
    # ~54 MiB on v7x (64 MiB physical), ~108 MiB on v5e/v6e (128 MiB physical)
    return int(min(cap * 85 // 100, 112 * 1024 * 1024))


def _select_tiles(rows, d_model, vocab, x_it, w_it, out_it, budget,
                  desired_tm=512, desired_tv=2048):
    """Pick (row_tile, vocab_tile) so the double-buffered working set fits `budget`.

    Accounts for: x tile (x2 buffers), W tile (x2), f32 logits intermediate,
    output tile (x2, pass 2) and the bias tile.
    """
    tm = max(8, _round_up(min(desired_tm, _round_up(rows, 8)), 8))
    tv = 128
    while True:
        fixed = 2 * tm * d_model * x_it + (1 << 20)      # x tile (double-buffered) + misc
        per_tv = (2 * d_model * w_it                     # W tile (double-buffered)
                  + 4 * tm                               # f32 logits intermediate
                  + 2 * tm * out_it                      # out tile (double-buffered)
                  + 8)                                   # bias tile
        tv = ((budget - fixed) // per_tv // 128) * 128
        if tv >= 128 or tm <= 8:
            break
        tm = max(8, tm // 2)
    tv = max(128, min(tv, desired_tv, _round_up(vocab, 128)))
    return tm, tv


def _lse_kernel(x_ref, w_ref, b_ref, lse_ref, m_scr, l_scr, *, row_tile):
    """Pass 1: online logsumexp.

    Grid = (vocab_tiles, row_tiles): the weight tile is resident across the inner
    row axis so W is streamed from HBM exactly once per pass.  m/l scratch covers
    the whole row chunk; the lse output is a single grid-resident block, so both
    grid axes must be "arbitrary" (single-core accumulation, no writeback races).
    """
    j = pl.program_id(0)                       # vocab tile (reduction axis, outermost)
    i = pl.program_id(1)                       # row tile
    rows = pl.ds(pl.multiple_of(i * row_tile, row_tile), row_tile)

    @pl.when(j == 0)
    def _():
        m_scr[rows, :] = jnp.full((row_tile, 1), -jnp.inf, jnp.float32)
        l_scr[rows, :] = jnp.zeros((row_tile, 1), jnp.float32)

    # Native-dtype operands straight into the MXU, f32 accumulation.
    logits = jnp.dot(x_ref[...], w_ref[...], preferred_element_type=jnp.float32)
    logits = logits + b_ref[...].astype(jnp.float32)

    m_prev = m_scr[rows, :]
    m_new = jnp.maximum(m_prev, jnp.max(logits, axis=-1, keepdims=True))
    l_new = l_scr[rows, :] * jnp.exp(m_prev - m_new) + jnp.sum(
        jnp.exp(logits - m_new), axis=-1, keepdims=True)
    m_scr[rows, :] = m_new
    l_scr[rows, :] = l_new

    @pl.when(j == pl.num_programs(0) - 1)
    def _():
        lse_ref[rows, :] = m_new + jnp.log(l_new)


def _out_kernel(x_ref, w_ref, b_ref, lse_ref, o_ref):
    """Pass 2: recompute the logits tile and write normalized log-probabilities."""
    logits = jnp.dot(x_ref[...], w_ref[...], preferred_element_type=jnp.float32)
    logits = logits + b_ref[...].astype(jnp.float32)
    o_ref[...] = (logits - lse_ref[...]).astype(o_ref.dtype)


def _run_chunk(xc, w_p, b_p, tm, tv, out_dtype, vmem_limit):
    """Both passes for one chunk of rows (chunk is a multiple of tm)."""
    cr, D = xc.shape
    V_pad = w_p.shape[1]
    n_r = cr // tm
    n_v = V_pad // tv

    flops = 2 * cr * D * V_pad
    x_bytes = n_v * cr * D * jnp.dtype(xc.dtype).itemsize
    w_bytes = w_p.size * jnp.dtype(w_p.dtype).itemsize

    # ---- Pass 1: per-row logsumexp (vocab = outer reduction axis) ----
    lse = pl.pallas_call(
        functools.partial(_lse_kernel, row_tile=tm),
        out_shape=jax.ShapeDtypeStruct((cr, 1), jnp.float32),
        grid_spec=pltpu.PrefetchScalarGridSpec(
            num_scalar_prefetch=0,
            grid=(n_v, n_r),
            in_specs=[
                pl.BlockSpec((tm, D), lambda j, i: (i, 0)),   # x row tile
                pl.BlockSpec((D, tv), lambda j, i: (0, j)),   # W tile: constant over inner axis
                pl.BlockSpec((1, tv), lambda j, i: (0, j)),   # bias tile
            ],
            out_specs=pl.BlockSpec((cr, 1), lambda j, i: (0, 0)),  # grid-resident lse
            scratch_shapes=[pltpu.VMEM((cr, 1), jnp.float32),      # running max
                            pltpu.VMEM((cr, 1), jnp.float32)],     # running sum-exp
        ),
        compiler_params=pltpu.CompilerParams(
            dimension_semantics=("arbitrary", "arbitrary"),
            vmem_limit_bytes=vmem_limit,
        ),
        cost_estimate=pl.CostEstimate(
            flops=flops,
            transcendentals=cr * V_pad,
            bytes_accessed=x_bytes + w_bytes + cr * 4),
    )(xc, w_p, b_p)

    # ---- Pass 2: recompute logits tile and normalize; lane-dense output tiles ----
    out = pl.pallas_call(
        _out_kernel,
        out_shape=jax.ShapeDtypeStruct((cr, V_pad), out_dtype),
        grid_spec=pltpu.PrefetchScalarGridSpec(
            num_scalar_prefetch=0,
            grid=(n_v, n_r),
            in_specs=[
                pl.BlockSpec((tm, D), lambda j, i: (i, 0)),
                pl.BlockSpec((D, tv), lambda j, i: (0, j)),   # W tile streamed once
                pl.BlockSpec((1, tv), lambda j, i: (0, j)),
                pl.BlockSpec((tm, 1), lambda j, i: (i, 0)),   # lse for this row tile
            ],
            out_specs=pl.BlockSpec((tm, tv), lambda j, i: (i, j)),
        ),
        compiler_params=pltpu.CompilerParams(
            dimension_semantics=("parallel", "parallel"),
            vmem_limit_bytes=vmem_limit,
        ),
        cost_estimate=pl.CostEstimate(
            flops=flops,
            transcendentals=0,
            bytes_accessed=x_bytes + w_bytes + cr * 4
            + cr * V_pad * jnp.dtype(out_dtype).itemsize),
    )(xc, w_p, b_p, lse)
    return out


@functools.partial(jax.jit, static_argnames=("out_dtype", "row_tile", "vocab_tile"))
def generator_forward(x, w, b, *, out_dtype=None, row_tile=None, vocab_tile=None):
    """log_softmax(x @ w + b, axis=-1).

    x: (B, T, D); w: (D, V) (transpose of nn.Linear's weight); b: (V,).
    Returns (B, T, V) log-probabilities in `out_dtype` (defaults to x.dtype; pass
    jnp.float32 explicitly if x is bf16 and full-precision log-probs are needed).
    """
    B, T, D = x.shape
    V = w.shape[1]
    rows = B * T
    out_dtype = x.dtype if out_dtype is None else out_dtype

    x_it = jnp.dtype(x.dtype).itemsize
    w_it = jnp.dtype(w.dtype).itemsize
    out_it = jnp.dtype(out_dtype).itemsize

    vmem_limit = _vmem_limit_bytes()
    chunk_rows_est = min(_ROW_CHUNK, _round_up(rows, 8))
    # lane-padded (chunk, 1) f32 buffers: m/l scratch + (double-buffered) resident lse
    scratch_est = 4 * chunk_rows_est * 128 * 4
    budget = max(int(vmem_limit * 0.75) - scratch_est, 4 * 1024 * 1024)

    tm, tv = _select_tiles(rows, D, V, x_it, w_it, out_it, budget)
    if row_tile is not None:
        tm = max(8, _round_up(row_tile, 8))
    if vocab_tile is not None:
        tv = max(128, _round_up(vocab_tile, 128))

    rows_p = _round_up(rows, tm)
    chunk = max(tm, (_ROW_CHUNK // tm) * tm)        # rows per pallas_call (multiple of tm)
    V_pad = _round_up(V, tv)                        # lane-dense 128-multiple vocab tiles

    x2 = x.reshape(rows, D)
    if rows_p != rows:
        x2 = jnp.pad(x2, ((0, rows_p - rows), (0, 0)))
    w_p = w if V_pad == V else jnp.pad(w, ((0, 0), (0, V_pad - V)))
    b_p = b.astype(jnp.float32).reshape(1, V)
    if V_pad != V:
        b_p = jnp.pad(b_p, ((0, 0), (0, V_pad - V)), constant_values=_NEG_INF_BIAS)

    chunks = []
    for start in range(0, rows_p, chunk):
        cr = min(chunk, rows_p - start)
        chunks.append(
            _run_chunk(x2[start:start + cr], w_p, b_p, tm, tv, out_dtype, vmem_limit))
    out = chunks[0] if len(chunks) == 1 else jnp.concatenate(chunks, axis=0)
    return out[:rows, :V].reshape(B, T, V)


def _reference(x, w, b):
    logits = jnp.einsum("btd,dv->btv", x, w) + b
    return jax.nn.log_softmax(logits, axis=-1)


if __name__ == "__main__":
    key = jax.random.PRNGKey(0)

    def _make(k, batch, tgt_len, d_model, vocab):
        kx, kw, kb = jax.random.split(k, 3)
        bound = 1.0 / (d_model ** 0.5)
        x = jax.random.normal(kx, (batch, tgt_len, d_model), jnp.float32)
        w = jax.random.uniform(kw, (d_model, vocab), jnp.float32, -bound, bound)
        b = jax.random.uniform(kb, (vocab,), jnp.float32, -bound, bound)
        # Round inputs to the bf16 grid so MXU bf16 passes (the default f32 matmul
        # precision on TPU) are exact and the comparison is precision-independent.
        rt = lambda a: a.astype(jnp.bfloat16).astype(jnp.float32)
        return rt(x), rt(w), rt(b)

    k1, k2 = jax.random.split(key)
    # (batch, tgt_len, d_model, vocab); the second case exercises row padding and
    # non-128-divisible vocab padding.
    for k, (bsz, tl, dm, vs) in ((k1, (2, 8, 32, 128)), (k2, (2, 5, 48, 1000))):
        x, w, b = _make(k, bsz, tl, dm, vs)
        out = jax.block_until_ready(generator_forward(x, w, b))
        ref = _reference(x, w, b)
        assert out.shape == (bsz, tl, vs)
        assert bool(jnp.all(jnp.isfinite(out)))
        assert jnp.allclose(out, ref, atol=1e-4, rtol=1e-4), \
            float(jnp.max(jnp.abs(out - ref)))
        # Rows of log-probs must exp-sum to 1.
        assert jnp.allclose(jnp.sum(jnp.exp(out), axis=-1), 1.0, atol=1e-4)

    print("KERNEL_OK")
</pallas_src>

<mosaic_0001>
module attributes {stable_mosaic.version = 11 : i64} {
  func.func @_out_kernel(%arg0: i32, %arg1: i32, %arg2: memref<16x32xf32, #tpu.memory_space<vmem>>, %arg3: memref<32x128xf32, #tpu.memory_space<vmem>>, %arg4: memref<1x128xf32, #tpu.memory_space<vmem>>, %arg5: memref<16x1xf32, #tpu.memory_space<vmem>>, %arg6: memref<16x128xf32, #tpu.memory_space<vmem>>) attributes {dimension_semantics = [#tpu.dimension_semantics<parallel>, #tpu.dimension_semantics<parallel>], iteration_bounds = array<i64: 1, 1>, scalar_prefetch = 0 : i64, scratch_operands = 0 : i64, tpu.core_type = #tpu.core_type<tc>, window_params = [{transform_indices = @transform_0, window_bounds = array<i64: 16, 32>}, {transform_indices = @transform_1, window_bounds = array<i64: 32, 128>}, {transform_indices = @transform_2, window_bounds = array<i64: 1, 128>}, {transform_indices = @transform_3, window_bounds = array<i64: 16, 1>}, {transform_indices = @transform_4, window_bounds = array<i64: 16, 128>}]} {
    %c0 = arith.constant 0 : index
    %c0_0 = arith.constant 0 : index
    %0 = vector.load %arg2[%c0, %c0_0] : memref<16x32xf32, #tpu.memory_space<vmem>>, vector<16x32xf32>
    %c0_1 = arith.constant 0 : index
    %c0_2 = arith.constant 0 : index
    %1 = vector.load %arg3[%c0_1, %c0_2] : memref<32x128xf32, #tpu.memory_space<vmem>>, vector<32x128xf32>
    %cst = arith.constant dense<0.000000e+00> : vector<16x128xf32>
    %2 = tpu.matmul %0, %1, %cst {dimension_numbers = #tpu.dot_dimension_numbers<[1], [0], [0], [1], [0, 0, 1, 1], [], []>} : vector<16x32xf32>, vector<32x128xf32>, vector<16x128xf32> -> vector<16x128xf32>
    %c0_3 = arith.constant 0 : index
    %c0_4 = arith.constant 0 : index
    %3 = vector.load %arg4[%c0_3, %c0_4] : memref<1x128xf32, #tpu.memory_space<vmem>>, vector<1x128xf32>
    %4 = vector.broadcast %3 : vector<1x128xf32> to vector<16x128xf32>
    %5 = arith.addf %2, %4 : vector<16x128xf32>
    %c0_5 = arith.constant 0 : index
    %c0_6 = arith.constant 0 : index
    %6 = vector.load %arg5[%c0_5, %c0_6] : memref<16x1xf32, #tpu.memory_space<vmem>>, vector<16x1xf32>
    %7 = vector.broadcast %6 : vector<16x1xf32> to vector<16x128xf32>
    %8 = arith.subf %5, %7 : vector<16x128xf32>
    %c0_7 = arith.constant 0 : index
    %c0_8 = arith.constant 0 : index
    %9 = vector.load %arg6[%c0_7, %c0_8] : memref<16x128xf32, #tpu.memory_space<vmem>>, vector<16x128xf32>
    tpu.vector_store %arg6[%c0_7, %c0_8], %8 {strides = array<i32>} : memref<16x128xf32, #tpu.memory_space<vmem>>, vector<16x128xf32>,
    return
  }
  func.func @transform_0(%arg0: i32, %arg1: i32) -> (i32, i32) {
    %c0_i32 = arith.constant 0 : i32
    %c0_i32_0 = arith.constant 0 : i32
    return %arg1, %c0_i32 : i32, i32
  }
  func.func @transform_1(%arg0: i32, %arg1: i32) -> (i32, i32) {
    %c0_i32 = arith.constant 0 : i32
    %c0_i32_0 = arith.constant 0 : i32
    return %c0_i32, %arg0 : i32, i32
  }
  func.func @transform_2(%arg0: i32, %arg1: i32) -> (i32, i32) {
    %c0_i32 = arith.constant 0 : i32
    %c0_i32_0 = arith.constant 0 : i32
    return %c0_i32, %arg0 : i32, i32
  }
  func.func @transform_3(%arg0: i32, %arg1: i32) -> (i32, i32) {
    %c0_i32 = arith.constant 0 : i32
    %c0_i32_0 = arith.constant 0 : i32
    return %arg1, %c0_i32 : i32, i32
  }
  func.func @transform_4(%arg0: i32, %arg1: i32) -> (i32, i32) {
    %c0_i32 = arith.constant 0 : i32
    return %arg1, %arg0 : i32, i32
  }
}

module attributes {stable_mosaic.version = 11 : i64} {
  func.func @_lse_kernel(%arg0: i32, %arg1: i32, %arg2: memref<16x32xf32, #tpu.memory_space<vmem>>, %arg3: memref<32x128xf32, #tpu.memory_space<vmem>>, %arg4: memref<1x128xf32, #tpu.memory_space<vmem>>, %arg5: memref<16x1xf32, #tpu.memory_space<vmem>>, %arg6: memref<16x1xf32, #tpu.memory_space<vmem>>, %arg7: memref<16x1xf32, #tpu.memory_space<vmem>>) attributes {dimension_semantics = [#tpu.dimension_semantics<arbitrary>, #tpu.dimension_semantics<arbitrary>], iteration_bounds = array<i64: 1, 1>, scalar_prefetch = 0 : i64, scratch_operands = 2 : i64, tpu.core_type = #tpu.core_type<tc>, window_params = [{transform_indices = @transform_0, window_bounds = array<i64: 16, 32>}, {transform_indices = @transform_1, window_bounds = array<i64: 32, 128>}, {transform_indices = @transform_2, window_bounds = array<i64: 1, 128>}, {pipeline_mode = #tpu.pipeline_mode<synchronous>, transform_indices = @transform_3, window_bounds = array<i64: 16, 1>}]} {
    %c16_i32 = arith.constant 16 : i32
    %0 = arith.muli %arg1, %c16_i32 : i32
    %1 = tpu.assume_multiple %0, 16 : i32
    %c0_i32 = arith.constant 0 : i32
    %2 = arith.cmpi eq, %arg0, %c0_i32 : i32
    %3 = arith.extui %2 : i1 to i32
    %c0_i32_0 = arith.constant 0 : i32
    %4 = arith.cmpi ne, %3, %c0_i32_0 : i32
    scf.if %4 {
      %cst_14 = arith.constant 0xFF800000 : f32
      %34 = vector.broadcast %cst_14 : f32 to vector<16x1xf32>
      %35 = arith.index_cast %1 : i32 to index
      %c0_15 = arith.constant 0 : index
      %36 = vector.load %arg6[%35, %c0_15] : memref<16x1xf32, #tpu.memory_space<vmem>>, vector<16x1xf32>
      tpu.vector_store %arg6[%35, %c0_15], %34 {strides = array<i32>} : memref<16x1xf32, #tpu.memory_space<vmem>>, vector<16x1xf32>,
      %cst_16 = arith.constant 0.000000e+00 : f32
      %37 = vector.broadcast %cst_16 : f32 to vector<16x1xf32>
      %38 = arith.index_cast %1 : i32 to index
      %c0_17 = arith.constant 0 : index
      %39 = vector.load %arg7[%38, %c0_17] : memref<16x1xf32, #tpu.memory_space<vmem>>, vector<16x1xf32>
      tpu.vector_store %arg7[%38, %c0_17], %37 {strides = array<i32>} : memref<16x1xf32, #tpu.memory_space<vmem>>, vector<16x1xf32>,
    } else {
    }
    %c0 = arith.constant 0 : index
    %c0_1 = arith.constant 0 : index
    %5 = vector.load %arg2[%c0, %c0_1] : memref<16x32xf32, #tpu.memory_space<vmem>>, vector<16x32xf32>
    %c0_2 = arith.constant 0 : index
    %c0_3 = arith.constant 0 : index
    %6 = vector.load %arg3[%c0_2, %c0_3] : memref<32x128xf32, #tpu.memory_space<vmem>>, vector<32x128xf32>
    %cst = arith.constant dense<0.000000e+00> : vector<16x128xf32>
    %7 = tpu.matmul %5, %6, %cst {dimension_numbers = #tpu.dot_dimension_numbers<[1], [0], [0], [1], [0, 0, 1, 1], [], []>} : vector<16x32xf32>, vector<32x128xf32>, vector<16x128xf32> -> vector<16x128xf32>
    %c0_4 = arith.constant 0 : index
    %c0_5 = arith.constant 0 : index
    %8 = vector.load %arg4[%c0_4, %c0_5] : memref<1x128xf32, #tpu.memory_space<vmem>>, vector<1x128xf32>
    %9 = vector.broadcast %8 : vector<1x128xf32> to vector<16x128xf32>
    %10 = arith.addf %7, %9 : vector<16x128xf32>
    %11 = arith.index_cast %1 : i32 to index
    %c0_6 = arith.constant 0 : index
    %12 = vector.load %arg6[%11, %c0_6] : memref<16x1xf32, #tpu.memory_space<vmem>>, vector<16x1xf32>
    %cst_7 = arith.constant dense<0xFF800000> : vector<16xf32>
    %13 = vector.multi_reduction <maximumf>, %10, %cst_7 [1] : vector<16x128xf32> to vector<16xf32>
    %14 = vector.shape_cast %13 : vector<16xf32> to vector<16x1xf32>
    %15 = arith.maximumf %12, %14 : vector<16x1xf32>
    %16 = arith.index_cast %1 : i32 to index
    %c0_8 = arith.constant 0 : index
    %17 = vector.load %arg7[%16, %c0_8] : memref<16x1xf32, #tpu.memory_space<vmem>>, vector<16x1xf32>
    %18 = arith.subf %12, %15 : vector<16x1xf32>
    %19 = math.exp %18 : vector<16x1xf32>
    %20 = arith.mulf %17, %19 : vector<16x1xf32>
    %21 = vector.broadcast %15 : vector<16x1xf32> to vector<16x128xf32>
    %22 = arith.subf %10, %21 : vector<16x128xf32>
    %23 = math.exp %22 : vector<16x128xf32>
    %cst_9 = arith.constant dense<0.000000e+00> : vector<16xf32>
    %24 = vector.multi_reduction <add>, %23, %cst_9 [1] : vector<16x128xf32> to vector<16xf32>
    %25 = vector.shape_cast %24 : vector<16xf32> to vector<16x1xf32>
    %26 = arith.addf %20, %25 : vector<16x1xf32>
    %27 = arith.index_cast %1 : i32 to index
    %c0_10 = arith.constant 0 : index
    %28 = vector.load %arg6[%27, %c0_10] : memref<16x1xf32, #tpu.memory_space<vmem>>, vector<16x1xf32>
    tpu.vector_store %arg6[%27, %c0_10], %15 {strides = array<i32>} : memref<16x1xf32, #tpu.memory_space<vmem>>, vector<16x1xf32>,
    %29 = arith.index_cast %1 : i32 to index
    %c0_11 = arith.constant 0 : index
    %30 = vector.load %arg7[%29, %c0_11] : memref<16x1xf32, #tpu.memory_space<vmem>>, vector<16x1xf32>
    tpu.vector_store %arg7[%29, %c0_11], %26 {strides = array<i32>} : memref<16x1xf32, #tpu.memory_space<vmem>>, vector<16x1xf32>,
    %c0_i32_12 = arith.constant 0 : i32
    %31 = arith.cmpi eq, %arg0, %c0_i32_12 : i32
    %32 = arith.extui %31 : i1 to i32
    %c0_i32_13 = arith.constant 0 : i32
    %33 = arith.cmpi ne, %32, %c0_i32_13 : i32
    scf.if %33 {
      %34 = math.log %26 : vector<16x1xf32>
      %35 = arith.addf %15, %34 : vector<16x1xf32>
      %36 = arith.index_cast %1 : i32 to index
      %c0_14 = arith.constant 0 : index
      %37 = vector.load %arg5[%36, %c0_14] : memref<16x1xf32, #tpu.memory_space<vmem>>, vector<16x1xf32>
      tpu.vector_store %arg5[%36, %c0_14], %35 {strides = array<i32>} : memref<16x1xf32, #tpu.memory_space<vmem>>, vector<16x1xf32>,
    } else {
    }
    return
  }
  func.func @transform_0(%arg0: i32, %arg1: i32) -> (i32, i32) {
    %c0_i32 = arith.constant 0 : i32
    %c0_i32_0 = arith.constant 0 : i32
    return %arg1, %c0_i32 : i32, i32
  }
  func.func @transform_1(%arg0: i32, %arg1: i32) -> (i32, i32) {
    %c0_i32 = arith.constant 0 : i32
    %c0_i32_0 = arith.constant 0 : i32
    return %c0_i32, %arg0 : i32, i32
  }
  func.func @transform_2(%arg0: i32, %arg1: i32) -> (i32, i32) {
    %c0_i32 = arith.constant 0 : i32
    %c0_i32_0 = arith.constant 0 : i32
    return %c0_i32, %arg0 : i32, i32
  }
  func.func @transform_3(%arg0: i32, %arg1: i32) -> (i32, i32) {
    %c0_i32 = arith.constant 0 : i32
    %c0_i32_0 = arith.constant 0 : i32
    %c0_i32_1 = arith.constant 0 : i32
    return %c0_i32, %c0_i32_0 : i32, i32
  }
}

</mosaic_0001>

<llo_original>
// kernel: generator_forward.3
$region0: #{generator_forward.3}
  #allocation0 [shape = 'u32[]', space=smem, size = 0x4, offset = 0x4, fixed_abs, tag = 'smem constant byte address 0x4 - core index']
  #allocation1 [shape = 'u32[72,128]{1,0:T(1,128)}', space=vmem, size = 0x9000, scoped, tag = 'internal scratch']
  %s0 = inlined_call_operand.hbm [shape: f32[16,32], index: 0, kind: input, shape index: {}]
  %s1 = inlined_call_operand.vmem [shape: f32[32,128], index: 1, kind: input, shape index: {}]
  %s2 = inlined_call_operand.vmem [shape: f32[1,128], index: 2, kind: input, shape index: {}]
  %s3 = inlined_call_operand.vmem [shape: f32[16,1], index: 3, kind: input, shape index: {}]
  %s4 = inlined_call_operand.hbm [shape: f32[16,128], index: 4, kind: output, shape index: {}]
  %s5 = sld [smem:[#allocation0]]
  $region30: #{generator_forward.3} parent=0
    _
  %s7 = ssub.s32 1, %s5
  %s8 = scalar_select 0, %s7, %s5
  $region1: #{generator_forward.3} parent=0
    #allocation2 [shape = 'u8[8192]{0}', space=vmem, size = 0x2000, scoped, tag = 'input window, operand 0, single buffered']
    #allocation3 [shape = 's32[1]{0}', space=sflag, size = 0x4, scoped, tag = 'scoped memory for generator_forward.3']
    #allocation4 [shape = 's32[1]{0}', space=sflag, size = 0x4, scoped, tag = 'scoped memory for generator_forward.3']
    #allocation5 [shape = 'u8[8192]{0}', space=vmem, size = 0x2000, scoped, tag = 'output window, operand 0, single buffered']
    %9 = vsyncpa [#allocation3], 0
    %10 = vsyncpa [#allocation4], 0
    // Predicated region
    $region2: #{generator_forward.3} parent=1 // pred_check
      _
    $region3: #{generator_forward.3} parent=1 // pred_check_branch
      %12 = sbr.rel (0) target = $region5
    $region4: #{generator_forward.3} parent=1 // pred_region
      %14 = vsyncadd [#allocation3], 0
      %s15 = sshll.u32 %s0, 4
      %s16 = int_to_ptr.hbm [resolvable:$true] %s15
      %s17 = sshll.u32 [#allocation2], 4
      %s18 = int_to_ptr.vmem [resolvable:$true] %s17
      %23 = dma.hbm_to_vmem [thread:$0]  %s16, 256, %s18, [#allocation3], 128, 128, 8
    $region5: #{generator_forward.3} parent=1 // pred_fallthru
      _
    // Predicated region
    $region6: #{generator_forward.3} parent=1 // pred_check
      _
    $region7: #{generator_forward.3} parent=1 // pred_check_branch
      %25 = sbr.rel (0) target = $region9
    $region8: #{generator_forward.3} parent=1 // pred_region
      _
    $region9: #{generator_forward.3} parent=1 // pred_fallthru
      _
    // Predicated region
    $region10: #{generator_forward.3} parent=1 // pred_check
      _
    $region11: #{generator_forward.3} parent=1 // pred_check_branch
      %27 = sbr.rel (0) target = $region13
    $region12: #{generator_forward.3} parent=1 // pred_region
      _
    $region13: #{generator_forward.3} parent=1 // pred_fallthru
      _
    // Predicated region
    $region14: #{generator_forward.3} parent=1 // pred_check
      _
    $region15: #{generator_forward.3} parent=1 // pred_check_branch
      %29 = sbr.rel (0) target = $region17
    $region16: #{generator_forward.3} parent=1 // pred_region
      _
    $region17: #{generator_forward.3} parent=1 // pred_fallthru
      _
    // Predicated region
    $region18: #{generator_forward.3} parent=1 // pred_check
      _
    $region19: #{generator_forward.3} parent=1 // pred_check_branch
      %31 = sbr.rel (0) target = $region21
    $region20: #{generator_forward.3} parent=1 // pred_region
      %33 = dma.done [#allocation3], 256
    $region21: #{generator_forward.3} parent=1 // pred_fallthru
      _
    %v34 = vld [vmem:[#allocation2] sm:$0xff]
    %v35 = vld [vmem:[#allocation2 + $0x8] sm:$0xff]
    %v36 = vld [vmem:[%s1] sm:$0xff]
    %v37 = vld [vmem:[%s1 + $0x8] sm:$0xff]
    %v38 = vld [vmem:[%s1 + $0x10] sm:$0xff]
    %v39 = vld [vmem:[%s1 + $0x18] sm:$0xff]
    %v40 = vld [vmem:[%s2] sm:$0x1]
    %v42 = vperm.slane %v40, 0
    %vm44 = vcmask 261120
    %v46 = vsel %vm44, %v34, 0
    %v49 = vsel %vm44, %v35, 0
    %51 = vmatpush.msra.mxu0 0.0
    %52 = vmatpush.msra.mxu0 0.0
    %53 = vmatpush.msra.mxu0 0.0
    %54 = vmatpush.msra.mxu0 0.0
    %55 = vmatpush.msra.mxu0 0.0
    %56 = vmatpush.msra.mxu0 0.0
    %57 = vmatpush.msra.mxu0 0.0
    %58 = vmatpush.msra.mxu0 0.0
    %59 = vmatpush.msra.mxu0 0.0
    %60 = vmatpush.msra.mxu0 0.0
    %61 = vmatpush.msra.mxu0 0.0
    %62 = vmatpush.msra.mxu0 0.0
    %63 = vmatpush.msra.mxu0 %v39
    %64 = vmatpush.msra.mxu0 %v38
    %65 = vmatpush.msra.mxu0 %v37
    %66 = vmatpush.msra.mxu0 %v36
    %67 = vmatmul.f32.gmra.mxu0 %v46
    %v68 = vpop.f32.mrf.mxu0
    %v69 = vadd.f32 %v42, %v68
    %70 = vmatmul.f32.gmra.mxu0 %v49
    %v71 = vpop.f32.mrf.mxu0
    %v72 = vadd.f32 %v42, %v71
    %73 = vdwg.mxu0
    %v74 = vld [vmem:[%s3] sm:$0xff]
    %v75 = vld [vmem:[%s3 + $0x8] sm:$0xff]
    %77 = vset.pattern.permute.xlu0 0
    %78 = vperm.xlu0 %77, %v74
    %v79 = vpop.permute.xlu0 %78
    %82 = vset.pattern.permute.xlu0 0
    %83 = vperm.xlu0 %82, %v75
    %v84 = vpop.permute.xlu0 %83
    %v86 = vsub.f32 %v69, %v79
    %v87 = vsub.f32 %v72, %v84
    %88 = vst [vmem:[#allocation5] sm:$0xff] %v86
    %89 = vst [vmem:[#allocation5 + $0x8] sm:$0xff] %v87
    // Predicated region
    $region22: #{generator_forward.3} parent=1 // pred_check
      _
    $region23: #{generator_forward.3} parent=1 // pred_check_branch
      %91 = sbr.rel (0) target = $region25
    $region24: #{generator_forward.3} parent=1 // pred_region
      %93 = vsyncadd [#allocation4], 0
      %s94 = sshll.u32 [#allocation5], 4
      %s95 = int_to_ptr.vmem [resolvable:$true] %s94
      %s96 = sshll.u32 %s4, 4
      %s97 = int_to_ptr.hbm [resolvable:$true] %s96
      %102 = dma.vmem_to_hbm [thread:$0]  %s95, 256, %s97, [#allocation4], 128, 128, 8
    $region25: #{generator_forward.3} parent=1 // pred_fallthru
      _
    // Predicated region
    $region26: #{generator_forward.3} parent=1 // pred_check
      _
    $region27: #{generator_forward.3} parent=1 // pred_check_branch
      %104 = sbr.rel (0) target = $region29
    $region28: #{generator_forward.3} parent=1 // pred_region
      %106 = dma.done [#allocation4], 256
    $region29: #{generator_forward.3} parent=1 // pred_fallthru
      _
    %107 = vsyncpa [#allocation3], 1
    %108 = vsyncpa [#allocation4], 1

// kernel: generator_forward.2
$region0: #{generator_forward.2}
  #allocation0 [shape = 'u32[]', space=smem, size = 0x4, offset = 0x4, fixed_abs, tag = 'smem constant byte address 0x4 - core index']
  #allocation1 [shape = 'u32[72,128]{1,0:T(1,128)}', space=vmem, size = 0x9000, scoped, tag = 'internal scratch']
  #allocation2 [shape = 'f32[16,1]{1,0:T(8,128)}', space=vmem, size = 0x2000, scoped, tag = 'scratch operand']
  #allocation3 [shape = 'f32[16,1]{1,0:T(8,128)}', space=vmem, size = 0x2000, scoped, tag = 'scratch operand']
  %s0 = inlined_call_operand.hbm [shape: f32[16,32], index: 0, kind: input, shape index: {}]
  %s1 = inlined_call_operand.hbm [shape: f32[32,128], index: 1, kind: input, shape index: {}]
  %s2 = inlined_call_operand.hbm [shape: f32[1,128], index: 2, kind: input, shape index: {}]
  %s3 = inlined_call_operand.vmem [shape: f32[16,1], index: 3, kind: output, shape index: {}]
  %s4 = sld [smem:[#allocation0]]
  $region42: #{generator_forward.2} parent=0
    _
  %s6 = ssub.s32 1, %s4
  %s7 = scalar_select 0, %s6, %s4
  $region1: #{generator_forward.2} parent=0
    #allocation4 [shape = 'u8[8192]{0}', space=vmem, size = 0x2000, scoped, tag = 'input window, operand 0, single buffered']
    #allocation5 [shape = 's32[1]{0}', space=sflag, size = 0x4, scoped, tag = 'scoped memory for generator_forward.2']
    #allocation6 [shape = 'u8[16384]{0}', space=vmem, size = 0x4000, scoped, tag = 'input window, operand 1, single buffered']
    #allocation7 [shape = 's32[1]{0}', space=sflag, size = 0x4, scoped, tag = 'scoped memory for generator_forward.2']
    #allocation8 [shape = 'u8[512]{0}', space=vmem, size = 0x400, scoped, tag = 'input window, operand 2, single buffered']
    %8 = vsyncpa [#allocation5], 0
    %9 = vsyncpa [#allocation7], 0
    // Predicated region
    $region2: #{generator_forward.2} parent=1 // pred_check
      _
    $region3: #{generator_forward.2} parent=1 // pred_check_branch
      %11 = sbr.rel (0) target = $region5
    $region4: #{generator_forward.2} parent=1 // pred_region
      %13 = vsyncadd [#allocation5], 0
      %s14 = sshll.u32 %s0, 4
      %s15 = int_to_ptr.hbm [resolvable:$true] %s14
      %s16 = sshll.u32 [#allocation4], 4
      %s17 = int_to_ptr.vmem [resolvable:$true] %s16
      %22 = dma.hbm_to_vmem [thread:$0]  %s15, 256, %s17, [#allocation5], 128, 128, 8
    $region5: #{generator_forward.2} parent=1 // pred_fallthru
      _
    // Predicated region
    $region6: #{generator_forward.2} parent=1 // pred_check
      _
    $region7: #{generator_forward.2} parent=1 // pred_check_branch
      %24 = sbr.rel (0) target = $region9
    $region8: #{generator_forward.2} parent=1 // pred_region
      %26 = vsyncadd [#allocation7], 0
      %s27 = sshll.u32 %s1, 4
      %s28 = int_to_ptr.hbm [resolvable:$true] %s27
      %s29 = sshll.u32 [#allocation6], 4
      %s30 = int_to_ptr.vmem [resolvable:$true] %s29
      %35 = dma.hbm_to_vmem [thread:$0]  %s28, 512, %s30, [#allocation7], 128, 128, 8
    $region9: #{generator_forward.2} parent=1 // pred_fallthru
      _
    // Predicated region
    $region10: #{generator_forward.2} parent=1 // pred_check
      _
    $region11: #{generator_forward.2} parent=1 // pred_check_branch
      %37 = sbr.rel (0) target = $region13
    $region12: #{generator_forward.2} parent=1 // pred_region
      %39 = vsyncadd [#allocation7], 0
      %s41 = sshll.u32 %s2, 4
      %s42 = int_to_ptr.hbm [resolvable:$true] %s41
      %s43 = sshll.u32 [#allocation8], 4
      %s44 = int_to_ptr.vmem [resolvable:$true] %s43
      %46 = dma.hbm_to_vmem [thread:$0]  %s42, 16, %s44, [#allocation7]
    $region13: #{generator_forward.2} parent=1 // pred_fallthru
      _
    // Predicated region
    $region14: #{generator_forward.2} parent=1 // pred_check
      _
    $region15: #{generator_forward.2} parent=1 // pred_check_branch
      %48 = sbr.rel (0) target = $region17
    $region16: #{generator_forward.2} parent=1 // pred_region
      %50 = dma.done [#allocation5], 256
    $region17: #{generator_forward.2} parent=1 // pred_fallthru
      _
    // Predicated region
    $region18: #{generator_forward.2} parent=1 // pred_check
      _
    $region19: #{generator_forward.2} parent=1 // pred_check_branch
      %52 = sbr.rel (0) target = $region21
    $region20: #{generator_forward.2} parent=1 // pred_region
      %54 = dma.done [#allocation7], 512
    $region21: #{generator_forward.2} parent=1 // pred_fallthru
      _
    // Predicated region
    $region22: #{generator_forward.2} parent=1 // pred_check
      _
    $region23: #{generator_forward.2} parent=1 // pred_check_branch
      %56 = sbr.rel (0) target = $region25
    $region24: #{generator_forward.2} parent=1 // pred_region
      %58 = dma.done [#allocation7], 16
    $region25: #{generator_forward.2} parent=1 // pred_fallthru
      _
    %s59 = smul.u32 0, 16
    %p60 = scmp.eq.s32.totalorder 0, 0
    // Predicated region
    $region26: #{generator_forward.2} parent=1 // pred_check
      %p61 = pneg %p60
    $region27: #{generator_forward.2} parent=1 // pred_check_branch
      %63 = sbr.rel (%p61) target = $region29
    $region28: #{generator_forward.2} parent=1 // pred_region
      %s64 = scalar_lea.vmem [#allocation2], %s59
      %vm65 = vcmask 7168
      %66 = vst.msk [vmem:[%s64] sm:$0xff] %vm65, -inf
      %67 = vst.msk [vmem:[%s64 + $0x8] sm:$0xff] %vm65, -inf
      %s68 = scalar_lea.vmem [#allocation3], %s59
      %69 = vst.msk [vmem:[%s68] sm:$0xff] %vm65, 0.0
      %70 = vst.msk [vmem:[%s68 + $0x8] sm:$0xff] %vm65, 0.0
    $region29: #{generator_forward.2} parent=1 // pred_fallthru
      _
    %v71 = vld [vmem:[#allocation4] sm:$0xff]
    %v72 = vld [vmem:[#allocation4 + $0x8] sm:$0xff]
    %v73 = vld [vmem:[#allocation6] sm:$0xff]
    %v74 = vld [vmem:[#allocation6 + $0x8] sm:$0xff]
    %v75 = vld [vmem:[#allocation6 + $0x10] sm:$0xff]
    %v76 = vld [vmem:[#allocation6 + $0x18] sm:$0xff]
    %v77 = vld [vmem:[#allocation8] sm:$0x1]
    %v79 = vperm.slane %v77, 0
    %vm81 = vcmask 261120
    %v83 = vsel %vm81, %v71, 0
    %v86 = vsel %vm81, %v72, 0
    %88 = vmatpush.msra.mxu0 0.0
    %89 = vmatpush.msra.mxu0 0.0
    %90 = vmatpush.msra.mxu0 0.0
    %91 = vmatpush.msra.mxu0 0.0
    %92 = vmatpush.msra.mxu0 0.0
    %93 = vmatpush.msra.mxu0 0.0
    %94 = vmatpush.msra.mxu0 0.0
    %95 = vmatpush.msra.mxu0 0.0
    %96 = vmatpush.msra.mxu0 0.0
    %97 = vmatpush.msra.mxu0 0.0
    %98 = vmatpush.msra.mxu0 0.0
    %99 = vmatpush.msra.mxu0 0.0
    %100 = vmatpush.msra.mxu0 %v76
    %101 = vmatpush.msra.mxu0 %v75
    %102 = vmatpush.msra.mxu0 %v74
    %103 = vmatpush.msra.mxu0 %v73
    %104 = vmatmul.f32.gmra.mxu0 %v83
    %v105 = vpop.f32.mrf.mxu0
    %v106 = vadd.f32 %v79, %v105
    %107 = vmatmul.f32.gmra.mxu0 %v86
    %v108 = vpop.f32.mrf.mxu0
    %v109 = vadd.f32 %v79, %v108
    %110 = vdwg.mxu0
    %s111 = scalar_lea.vmem [#allocation2], %s59
    %v112 = vld [vmem:[%s111] sm:$0xff]
    %v113 = vld [vmem:[%s111 + $0x8] sm:$0xff]
    %114 = vmax.xlane.f32.xlu0 %v106
    %v115 = vpop.xlane.xlu0 %114
    %116 = vmax.xlane.f32.xlu0 %v109
    %v117 = vpop.xlane.xlu0 %116
    %v118 = vmax.f32 %v112, %v115
    %v119 = vmax.f32 %v113, %v117
    %s120 = scalar_lea.vmem [#allocation3], %s59
    %v121 = vld [vmem:[%s120] sm:$0xff]
    %v122 = vld [vmem:[%s120 + $0x8] sm:$0xff]
    %v123 = vsub.f32 %v112, %v118
    %v124 = vsub.f32 %v113, %v119
    %v125 = vmul.f32 %v123, 1.442695
    %v126 = vpow.pop %v125
    %v127 = vmul.f32 %v124, 1.442695
    %v128 = vpow.pop %v127
    %v129 = vmul.f32 %v121, %v126
    %v130 = vmul.f32 %v122, %v128
    %132 = vset.pattern.permute.xlu0 0
    %133 = vperm.xlu0 %132, %v118
    %v134 = vpop.permute.xlu0 %133
    %137 = vset.pattern.permute.xlu0 0
    %138 = vperm.xlu0 %137, %v119
    %v139 = vpop.permute.xlu0 %138
    %v141 = vsub.f32 %v106, %v134
    %v142 = vsub.f32 %v109, %v139
    %v143 = vmul.f32 %v141, 1.442695
    %v144 = vpow.pop %v143
    %v145 = vmul.f32 %v142, 1.442695
    %v146 = vpow.pop %v145
    %147 = vadd.xlane.f32.xlu0 %v144
    %v148 = vpop.xlane.xlu0 %147
    %149 = vadd.xlane.f32.xlu0 %v146
    %v150 = vpop.xlane.xlu0 %149
    %v151 = vadd.f32 %v129, %v148
    %v152 = vadd.f32 %v130, %v150
    %vm153 = vcmask 7168
    %154 = vst.msk [vmem:[%s111] sm:$0xff] %vm153, %v118
    %155 = vst.msk [vmem:[%s111 + $0x8] sm:$0xff] %vm153, %v119
    %156 = vst.msk [vmem:[%s120] sm:$0xff] %vm153, %v151
    %157 = vst.msk [vmem:[%s120 + $0x8] sm:$0xff] %vm153, %v152
    // Predicated region
    $region30: #{generator_forward.2} parent=1 // pred_check
      %p158 = pneg %p60
    $region31: #{generator_forward.2} parent=1 // pred_check_branch
      %160 = sbr.rel (%p158) target = $region33
    $region32: #{generator_forward.2} parent=1 // pred_region
      %v161 = vlog2.pop %v151
      %v162 = vmul.f32 %v161, 0.6931472
      %v163 = vlog2.pop %v152
      %v164 = vmul.f32 %v163, 0.6931472
      %v165 = vadd.f32 %v118, %v162
      %v166 = vadd.f32 %v119, %v164
      %s167 = scalar_lea.vmem %s3, %s59
      %168 = vst.msk [vmem:[%s167] sm:$0xff] %vm153, %v165
      %169 = vst.msk [vmem:[%s167 + $0x8] sm:$0xff] %vm153, %v166
    $region33: #{generator_forward.2} parent=1 // pred_fallthru
      _
    // Predicated region
    $region34: #{generator_forward.2} parent=1 // pred_check
      _
    $region35: #{generator_forward.2} parent=1 // pred_check_branch
      %171 = sbr.rel (0) target = $region37
    $region36: #{generator_forward.2} parent=1 // pred_region
      _
    $region37: #{generator_forward.2} parent=1 // pred_fallthru
      _
    // Predicated region
    $region38: #{generator_forward.2} parent=1 // pred_check
      _
    $region39: #{generator_forward.2} parent=1 // pred_check_branch
      %173 = sbr.rel (0) target = $region41
    $region40: #{generator_forward.2} parent=1 // pred_region
      _
    $region41: #{generator_forward.2} parent=1 // pred_fallthru
      _
    %174 = vsyncpa [#allocation5], 1
    %175 = vsyncpa [#allocation7], 1

</llo_original>
